<compile_context>
chip_gen: v7x
topology: tpu7x:2x2x1
jax: 0.10.0
libtpu: 0.0.40
codegen_flags: <defaults>
</compile_context>

<pallas_src>
import math
import numpy as np
import jax
import jax.numpy as jnp
from jax.experimental import pallas as pl
from jax.experimental.pallas import tpu as pltpu


# ----------------------------------------------------------------------------
# Host-side glue: separable resample operators matching the reference
# `resample` (lanczos anti-alias conv with reflect padding, then bicubic
# interpolation with align_corners=True, cubic A = -0.75).
# ----------------------------------------------------------------------------
def _sinc(x):
    x = np.asarray(x, dtype=np.float64)
    out = np.ones_like(x)
    nz = x != 0
    out[nz] = np.sin(np.pi * x[nz]) / (np.pi * x[nz])
    return out


def _lanczos(x, a):
    cond = np.logical_and(-a < x, x < a)
    out = np.where(cond, _sinc(x) * _sinc(x / a), 0.0)
    return out / out.sum()


def _ramp(ratio, width):
    n = math.ceil(width / ratio + 1)
    out = np.arange(n, dtype=np.float64) * ratio
    full = np.concatenate([-out[1:][::-1], out])
    return full[1:-1]


def _lanczos_matrix(h, dh):
    """h x h matrix: reflect-padded lanczos conv along one axis."""
    k = _lanczos(_ramp(dh / h, 2), 2)
    K = k.shape[0]
    p = (K - 1) // 2
    L = np.zeros((h, h), dtype=np.float64)
    for y in range(h):
        for t in range(K):
            src = y + t - p
            if src < 0:
                src = -src
            if src > h - 1:
                src = 2 * (h - 1) - src
            L[y, src] += k[t]
    return L


def _bicubic_matrix(h, dh, A=-0.75):
    """dh x h matrix: F.interpolate(mode='bicubic', align_corners=True)."""
    def W(d):
        d = abs(d)
        if d <= 1.0:
            return (A + 2) * d ** 3 - (A + 3) * d ** 2 + 1.0
        elif d < 2.0:
            return A * d ** 3 - 5 * A * d ** 2 + 8 * A * d - 4 * A
        return 0.0

    B = np.zeros((dh, h), dtype=np.float64)
    for y in range(dh):
        x = 0.0 if dh == 1 else y * (h - 1) / (dh - 1)
        x0 = math.floor(x)
        t = x - x0
        ws = (W(t + 1.0), W(t), W(1.0 - t), W(2.0 - t))
        idx = (x0 - 1, x0, x0 + 1, x0 + 2)
        for w_, i_ in zip(ws, idx):
            B[y, min(max(i_, 0), h - 1)] += w_
    return B


def _resample_matrix(h, dh):
    B = _bicubic_matrix(h, dh)
    if dh < h:
        return B @ _lanczos_matrix(h, dh)
    return B


# ----------------------------------------------------------------------------
# Tiling helpers
# ----------------------------------------------------------------------------
def _pick_group_size(cutn, P, target_rows=256):
    """Largest divisor G of cutn with G*P <= target_rows MXU rows, preferring
    to keep >= 2 grid steps so 'parallel' can shard across v7x's 2 TCs."""
    divisors = [g for g in range(1, cutn + 1) if cutn % g == 0]
    fit = [g for g in divisors if g * P <= target_rows] or [1]
    two_step = [g for g in fit if cutn // g >= 2]
    return max(two_step) if two_step else max(fit)


def _vmem_limit_bytes():
    """Generation-aware VMEM cap: ~48 MiB on v7x (64 MiB phys), ~100 MiB on
    v5e/v6e (128 MiB phys), always leaving >= 16 MiB for Mosaic scratch."""
    phys = 64 * 1024 * 1024  # conservative fallback (v7x-sized)
    try:
        phys = int(pltpu.get_tpu_info().vmem_capacity_bytes)
    except Exception:
        pass
    return max(32 * 1024 * 1024, min(phys - 16 * 1024 * 1024, 100 * 1024 * 1024))


# ----------------------------------------------------------------------------
# Wrapper + Pallas kernel
# ----------------------------------------------------------------------------
def make_cutouts(x, cut_size, cutn, cut_pow=1.0, noise_fac=0.1, seed=0):
    x = jnp.asarray(x)
    N, C, sideY, sideX = x.shape
    max_size = min(sideX, sideY)
    min_size = min(sideX, sideY, cut_size)
    P = cut_size
    NC = N * C
    M = cutn * N

    # --- host-side cutout geometry + resample operators -----------------------
    # NOTE: for a training loop this per-call Python/numpy work and the H2D
    # copies dominate wall clock; cache/precompute it off the critical path.
    # TODO(synk): kornia augmentation pipeline (flip/solarize/sharpness/affine/
    # perspective/jitter/erasing) has no clean Pallas equivalent; skipped.
    rng = np.random.default_rng(seed)
    rh_np = np.zeros((cutn, P, sideY), dtype=np.float32)
    rwt_bd_np = np.zeros((cutn, NC * sideX, NC * P), dtype=np.float32)
    eye_nc = np.eye(NC, dtype=np.float32)
    for i in range(cutn):
        size = int(rng.random() ** cut_pow * (max_size - min_size) + min_size)
        size = max(size, 1)
        offsetx = int(rng.integers(0, sideX - size + 1))
        offsety = int(rng.integers(0, sideY - size + 1))
        R = _resample_matrix(size, P).astype(np.float32)          # (P, size)
        # Full-axis operators: crop window encoded as zero weights outside
        # [offset, offset+size) -> no padded per-cutout crops ever hit HBM.
        rh_np[i, :, offsety:offsety + size] = R
        rwt = np.zeros((sideX, P), dtype=np.float32)
        rwt[offsetx:offsetx + size, :] = R.T
        # Block-diagonal column operator: one MXU matmul emits the whole
        # lane-dense (P, NC*P) slab -> single full-width store per cutout.
        rwt_bd_np[i] = np.kron(eye_nc, rwt)

    # Image passed ONCE: H on sublanes, (n, c, w) flattened on lanes, bf16.
    x3 = jnp.transpose(x, (2, 0, 1, 3)).reshape(sideY, NC * sideX)
    x3 = x3.astype(jnp.bfloat16)
    rh = jnp.asarray(rh_np.reshape(cutn * P, sideY), dtype=jnp.bfloat16)
    rwt_bd = jnp.asarray(rwt_bd_np, dtype=jnp.bfloat16)   # bf16 MXU, f32 acc

    # G cutouts per grid step: fills the MXU M dimension (G*P rows) and
    # amortizes per-step overhead; keeps >= 2 grid steps when possible.
    G = _pick_group_size(cutn, P)
    n_steps = cutn // G

    def kernel(x_ref, rh_ref, rwt_ref, o_ref):
        # 1) One big lane-dense bf16 MXU matmul over the H (row) axis for all
        #    G cutouts and all N*C planes at once: (G*P, H) @ (H, NC*W).
        u = jnp.dot(rh_ref[...], x_ref[...],
                    preferred_element_type=jnp.float32)           # (G*P, NC*W)
        u = u.astype(jnp.bfloat16)                                # bf16 MXU path
        # 2) Per cutout: ONE (P, NC*W) @ (NC*W, NC*P) matmul against the
        #    block-diagonal column operator, then ONE full-lane-width store
        #    (no per-(n,c) loop, no 32-lane masked partial stores).
        for g in range(G):                                        # tiny static loop
            o_ref[g * P:(g + 1) * P, :] = jnp.dot(
                u[g * P:(g + 1) * P, :], rwt_ref[g],
                preferred_element_type=jnp.float32).astype(o_ref.dtype)

    # Resident image: constant index_map; single-buffer it (the block never
    # changes across the grid), halving its VMEM footprint (matters on v7x).
    try:
        img_spec = pl.BlockSpec((sideY, NC * sideX), lambda g: (0, 0),
                                pipeline_mode=pl.Buffered(1))
    except (TypeError, AttributeError):
        img_spec = pl.BlockSpec((sideY, NC * sideX), lambda g: (0, 0))

    slab = pl.pallas_call(
        kernel,
        out_shape=jax.ShapeDtypeStruct((cutn * P, NC * P), jnp.float32),
        grid=(n_steps,),
        in_specs=[
            img_spec,
            pl.BlockSpec((G * P, sideY), lambda g: (g, 0)),
            pl.BlockSpec((G, NC * sideX, NC * P), lambda g: (g, 0, 0)),
        ],
        out_specs=pl.BlockSpec((G * P, NC * P), lambda g: (g, 0)),
        compiler_params=pltpu.CompilerParams(
            dimension_semantics=("parallel",),
            vmem_limit_bytes=_vmem_limit_bytes(),
        ),
    )(x3, rh, rwt_bd)

    # Lane-dense slab (cutn*P, N*C*P) -> (cutn*N, C, P, P) (torch cat order).
    out = slab.reshape(cutn, P, N, C, P).transpose(0, 2, 3, 1, 4)

    # Gaussian noise: torch does `batch + facs * randn_like(batch)` with
    # facs ~ U(0, noise_fac) per cutout.  Applied here with jax.random because
    # in-kernel pltpu PRNG has no CPU/interpret lowering.
    if noise_fac:
        kf, kn = jax.random.split(jax.random.PRNGKey(seed))
        facs = jax.random.uniform(kf, (cutn, 1, 1, 1, 1), minval=0.0,
                                  maxval=float(noise_fac), dtype=jnp.float32)
        out = out + facs * jax.random.normal(kn, out.shape, dtype=jnp.float32)

    return out.reshape(M, C, P, P), (x3, rh, rwt_bd)


if __name__ == "__main__":
    key = jax.random.PRNGKey(0)
    N, C, side = 2, 3, 64
    cut_size, cutn = 32, 4
    x = jax.random.normal(key, (N, C, side, side), dtype=jnp.float32)

    # --- numerics check against a pure-JAX reference (noise disabled) ---
    out0, (x3, rh, rwt_bd) = make_cutouts(
        x, cut_size, cutn, cut_pow=1.0, noise_fac=0.0, seed=0)
    out0 = jax.block_until_ready(out0)

    P = cut_size
    NC = N * C
    u = jnp.dot(rh.astype(jnp.float32), x3.astype(jnp.float32))   # (cutn*P, NC*W)
    u = u.astype(jnp.bfloat16).astype(jnp.float32)                # mimic kernel cast
    u = u.reshape(cutn, P, NC * side)
    ref = jnp.einsum('ipk,ikq->ipq', u, rwt_bd.astype(jnp.float32))
    ref = ref.reshape(cutn, P, N, C, P).transpose(0, 2, 3, 1, 4)
    ref = ref.reshape(cutn * N, C, P, P)
    np.testing.assert_allclose(np.asarray(out0), np.asarray(ref),
                               atol=1e-2, rtol=1e-2)

    # --- full forward with gaussian noise ---
    out, _ = make_cutouts(x, cut_size, cutn, cut_pow=1.0, noise_fac=0.1, seed=0)
    out = jax.block_until_ready(out)
    assert out.shape == (cutn * N, C, cut_size, cut_size)
    assert bool(jnp.all(jnp.isfinite(out)))
    print("KERNEL_OK")
</pallas_src>

<mosaic_0001>
module attributes {stable_mosaic.version = 11 : i64} {
  func.func @kernel(%arg0: i32, %arg1: memref<64x384xbf16, #tpu.memory_space<vmem>>, %arg2: memref<64x64xbf16, #tpu.memory_space<vmem>>, %arg3: memref<2x384x192xbf16, #tpu.memory_space<vmem>>, %arg4: memref<64x192xf32, #tpu.memory_space<vmem>>) attributes {dimension_semantics = [#tpu.dimension_semantics<parallel>], iteration_bounds = array<i64: 2>, scalar_prefetch = 0 : i64, scratch_operands = 0 : i64, tpu.core_type = #tpu.core_type<tc>, window_params = [{pipeline_mode = #tpu.pipeline_mode<synchronous>, transform_indices = @transform_0, window_bounds = array<i64: 64, 384>}, {transform_indices = @transform_1, window_bounds = array<i64: 64, 64>}, {transform_indices = @transform_2, window_bounds = array<i64: 2, 384, 192>}, {transform_indices = @transform_3, window_bounds = array<i64: 64, 192>}]} {
    %c0 = arith.constant 0 : index
    %c0_0 = arith.constant 0 : index
    %0 = vector.load %arg2[%c0, %c0_0] : memref<64x64xbf16, #tpu.memory_space<vmem>>, vector<64x64xbf16>
    %c0_1 = arith.constant 0 : index
    %c0_2 = arith.constant 0 : index
    %1 = vector.load %arg1[%c0_1, %c0_2] : memref<64x384xbf16, #tpu.memory_space<vmem>>, vector<64x384xbf16>
    %cst = arith.constant dense<0.000000e+00> : vector<64x384xf32>
    %2 = tpu.matmul %0, %1, %cst {dimension_numbers = #tpu.dot_dimension_numbers<[1], [0], [0], [1], [0, 0, 1, 1], [], []>} : vector<64x64xbf16>, vector<64x384xbf16>, vector<64x384xf32> -> vector<64x384xf32>
    %3 = arith.truncf %2 : vector<64x384xf32> to vector<64x384xbf16>
    %4 = vector.extract_strided_slice %3 {offsets = [0, 0], sizes = [32, 384], strides = [1, 1]} : vector<64x384xbf16> to vector<32x384xbf16>
    %c0_3 = arith.constant 0 : index
    %c0_4 = arith.constant 0 : index
    %c0_5 = arith.constant 0 : index
    %5 = vector.load %arg3[%c0_3, %c0_4, %c0_5] : memref<2x384x192xbf16, #tpu.memory_space<vmem>>, vector<1x384x192xbf16>
    %6 = vector.shape_cast %5 : vector<1x384x192xbf16> to vector<384x192xbf16>
    %cst_6 = arith.constant dense<0.000000e+00> : vector<32x192xf32>
    %7 = tpu.matmul %4, %6, %cst_6 {dimension_numbers = #tpu.dot_dimension_numbers<[1], [0], [0], [1], [0, 0, 1, 1], [], []>} : vector<32x384xbf16>, vector<384x192xbf16>, vector<32x192xf32> -> vector<32x192xf32>
    %c0_7 = arith.constant 0 : index
    %c0_8 = arith.constant 0 : index
    %8 = vector.load %arg4[%c0_7, %c0_8] : memref<64x192xf32, #tpu.memory_space<vmem>>, vector<32x192xf32>
    tpu.vector_store %arg4[%c0_7, %c0_8], %7 {strides = array<i32>} : memref<64x192xf32, #tpu.memory_space<vmem>>, vector<32x192xf32>,
    %9 = vector.extract_strided_slice %3 {offsets = [32, 0], sizes = [32, 384], strides = [1, 1]} : vector<64x384xbf16> to vector<32x384xbf16>
    %c1 = arith.constant 1 : index
    %c0_9 = arith.constant 0 : index
    %c0_10 = arith.constant 0 : index
    %10 = vector.load %arg3[%c1, %c0_9, %c0_10] : memref<2x384x192xbf16, #tpu.memory_space<vmem>>, vector<1x384x192xbf16>
    %11 = vector.shape_cast %10 : vector<1x384x192xbf16> to vector<384x192xbf16>
    %cst_11 = arith.constant dense<0.000000e+00> : vector<32x192xf32>
    %12 = tpu.matmul %9, %11, %cst_11 {dimension_numbers = #tpu.dot_dimension_numbers<[1], [0], [0], [1], [0, 0, 1, 1], [], []>} : vector<32x384xbf16>, vector<384x192xbf16>, vector<32x192xf32> -> vector<32x192xf32>
    %c32 = arith.constant 32 : index
    %c0_12 = arith.constant 0 : index
    %13 = vector.load %arg4[%c32, %c0_12] : memref<64x192xf32, #tpu.memory_space<vmem>>, vector<32x192xf32>
    tpu.vector_store %arg4[%c32, %c0_12], %12 {strides = array<i32>} : memref<64x192xf32, #tpu.memory_space<vmem>>, vector<32x192xf32>,
    return
  }
  func.func @transform_0(%arg0: i32) -> (i32, i32) {
    %c0_i32 = arith.constant 0 : i32
    %c0_i32_0 = arith.constant 0 : i32
    %c0_i32_1 = arith.constant 0 : i32
    return %c0_i32, %c0_i32_0 : i32, i32
  }
  func.func @transform_1(%arg0: i32) -> (i32, i32) {
    %c0_i32 = arith.constant 0 : i32
    %c0_i32_0 = arith.constant 0 : i32
    return %arg0, %c0_i32 : i32, i32
  }
  func.func @transform_2(%arg0: i32) -> (i32, i32, i32) {
    %c0_i32 = arith.constant 0 : i32
    %c0_i32_0 = arith.constant 0 : i32
    %c0_i32_1 = arith.constant 0 : i32
    return %arg0, %c0_i32, %c0_i32_0 : i32, i32, i32
  }
  func.func @transform_3(%arg0: i32) -> (i32, i32) {
    %c0_i32 = arith.constant 0 : i32
    %c0_i32_0 = arith.constant 0 : i32
    return %arg0, %c0_i32 : i32, i32
  }
}

</mosaic_0001>

<llo_original>
// kernel: tpu_custom_call.1
$region0: #{tpu_custom_call.1}
  #allocation0 [shape = 'u32[]', space=smem, size = 0x4, offset = 0x4, fixed_abs, tag = 'smem constant byte address 0x4 - core index']
  #allocation1 [shape = 'u32[144,128]{1,0:T(1,128)}', space=vmem, size = 0x12000, scoped, tag = 'internal scratch']
  %s0 = inlined_call_operand.vmem [shape: bf16[64,384], index: 0, kind: input, shape index: {}]
  %s1 = inlined_call_operand.vmem [shape: bf16[128,64], index: 1, kind: input, shape index: {}]
  %s2 = inlined_call_operand.vmem [shape: bf16[4,384,192], index: 2, kind: input, shape index: {}]
  %s3 = inlined_call_operand.vmem [shape: f32[128,192], index: 3, kind: output, shape index: {}]
  %s4 = sld [smem:[#allocation0]]
  $region45: #{tpu_custom_call.1} parent=0
    _
  %s6 = ssub.s32 1, %s4
  %s7 = scalar_select 0, %s6, %s4
  loop: start=0, step=1, limit=4
  $region2: #{tpu_custom_call.1} parent=0 // loop_pre_header
    _
  $region3: #{tpu_custom_call.1} parent=0 // loop_header
    %s9 = sphi 0, %s13
    %p10 = scmp.ge.s32.totalorder %s9, 4
    %s17 = sphi 0, %s17
    %s19 = sphi 0, %s17
    %s20 = sphi 0, %s19
    %s34 = sphi 0, %s20
    %s40 = sphi 0, %s42
    %s43 = sphi 0, %s40
    %s44 = sphi 0, %s43
    %s60 = sphi 0, %s44
    %s66 = sphi 0, %s68
    %s69 = sphi 0, %s66
    %s70 = sphi 0, %s69
    %s86 = sphi 0, %s70
    %s92 = sphi 0, %s94
    %s95 = sphi 0, %s92
    %s96 = sphi 0, %s95
    %s112 = sphi 0, %s96
  $region4: #{tpu_custom_call.1} parent=0 // loop_header_branch
    %12 = sbr.rel (%p10) target = $region8
  $region5: #{tpu_custom_call.1} parent=0 // loop_body
    %s14 = ssub.s32 %s9, 1
    %s15 = ssub.s32 %s9, 2
    %s16 = sadd.s32 %s9, 1
    %s18 = sadd.s32 %s17, 1
    %p21 = scmp.eq.s32.totalorder %s9, 1
    %p22 = scmp.ne.s32.totalorder %s17, %s19
    %p23 = scmp.eq.s32.totalorder %s9, 0
    %p24 = por %p22, %p23
    %p25 = scmp.ne.s32.totalorder %s17, %s19
    %p26 = scmp.eq.s32.totalorder %s14, 1
    %p27 = por %p25, %p26
    %p28 = scmp.ne.s32.totalorder %s19, %s20
    %p29 = scmp.eq.s32.totalorder %s14, 0
    %p30 = por %p28, %p29
    %p31 = scmp.ne.s32.totalorder %s19, %s20
    %p32 = scmp.eq.s32.totalorder %s15, 1
    %p33 = por %p31, %p32
    %p35 = scmp.ne.s32.totalorder %s20, %s34
    %p36 = scmp.eq.s32.totalorder %s15, 0
    %p37 = por %p35, %p36
    %s38 = ssub.s32 %s9, %s16
    %p39 = scmp.eq.s32.totalorder %s38, 0
    %s41 = sadd.s32 %s40, 1
    %s42 = scalar_select %p39, %s40, %s41
    %p45 = pneg %p39
    %p46 = scmp.eq.s32.totalorder %s9, 1
    %p47 = por %p45, %p46
    %p48 = scmp.ne.s32.totalorder %s40, %s43
    %p49 = scmp.eq.s32.totalorder %s9, 0
    %p50 = por %p48, %p49
    %p51 = scmp.ne.s32.totalorder %s40, %s43
    %p52 = scmp.eq.s32.totalorder %s14, 1
    %p53 = por %p51, %p52
    %p54 = scmp.ne.s32.totalorder %s43, %s44
    %p55 = scmp.eq.s32.totalorder %s14, 0
    %p56 = por %p54, %p55
    %p57 = scmp.ne.s32.totalorder %s43, %s44
    %p58 = scmp.eq.s32.totalorder %s15, 1
    %p59 = por %p57, %p58
    %p61 = scmp.ne.s32.totalorder %s44, %s60
    %p62 = scmp.eq.s32.totalorder %s15, 0
    %p63 = por %p61, %p62
    %s64 = ssub.s32 %s9, %s16
    %p65 = scmp.eq.s32.totalorder %s64, 0
    %s67 = sadd.s32 %s66, 1
    %s68 = scalar_select %p65, %s66, %s67
    %p71 = pneg %p65
    %p72 = scmp.eq.s32.totalorder %s9, 1
    %p73 = por %p71, %p72
    %p74 = scmp.ne.s32.totalorder %s66, %s69
    %p75 = scmp.eq.s32.totalorder %s9, 0
    %p76 = por %p74, %p75
    %p77 = scmp.ne.s32.totalorder %s66, %s69
    %p78 = scmp.eq.s32.totalorder %s14, 1
    %p79 = por %p77, %p78
    %p80 = scmp.ne.s32.totalorder %s69, %s70
    %p81 = scmp.eq.s32.totalorder %s14, 0
    %p82 = por %p80, %p81
    %p83 = scmp.ne.s32.totalorder %s69, %s70
    %p84 = scmp.eq.s32.totalorder %s15, 1
    %p85 = por %p83, %p84
    %p87 = scmp.ne.s32.totalorder %s70, %s86
    %p88 = scmp.eq.s32.totalorder %s15, 0
    %p89 = por %p87, %p88
    %s90 = ssub.s32 %s9, %s16
    %p91 = scmp.eq.s32.totalorder %s90, 0
    %s93 = sadd.s32 %s92, 1
    %s94 = scalar_select %p91, %s92, %s93
    %p97 = pneg %p91
    %p98 = scmp.eq.s32.totalorder %s9, 1
    %p99 = por %p97, %p98
    %p100 = scmp.ne.s32.totalorder %s92, %s95
    %p101 = scmp.eq.s32.totalorder %s9, 0
    %p102 = por %p100, %p101
    %p103 = scmp.ne.s32.totalorder %s92, %s95
    %p104 = scmp.eq.s32.totalorder %s14, 1
    %p105 = por %p103, %p104
    %p106 = scmp.ne.s32.totalorder %s95, %s96
    %p107 = scmp.eq.s32.totalorder %s14, 0
    %p108 = por %p106, %p107
    %p109 = scmp.ne.s32.totalorder %s95, %s96
    %p110 = scmp.eq.s32.totalorder %s15, 1
    %p111 = por %p109, %p110
    %p113 = scmp.ne.s32.totalorder %s96, %s112
    %p114 = scmp.eq.s32.totalorder %s15, 0
    %p115 = por %p113, %p114
    %p116 = scmp.le.s32.totalorder 1, %s9
    %p117 = scmp.lt.s32.totalorder %s9, 3
    %p118 = pnand %p116, %p117
    %p119 = pneg %p118
    // Predicated region
    $region9: #{tpu_custom_call.1} parent=5 // pred_check
      _
    $region10: #{tpu_custom_call.1} parent=5 // pred_check_branch
      %121 = sbr.rel (%p118) target = $region12
    $region11: #{tpu_custom_call.1} parent=5 // pred_region
      %s122 = ssub.s32 %s9, 1
      // Predicated region
      $region13: #{tpu_custom_call.1} parent=11 // pred_check
        %p123 = pneg %p30
      $region14: #{tpu_custom_call.1} parent=11 // pred_check_branch
        %125 = sbr.rel (%p123) target = $region16
      $region15: #{tpu_custom_call.1} parent=11 // pred_region
        _
      $region16: #{tpu_custom_call.1} parent=11 // pred_fallthru
        _
    $region12: #{tpu_custom_call.1} parent=5 // pred_fallthru
      _
    %p126 = scmp.lt.s32.totalorder %s9, 2
    // Predicated region
    $region17: #{tpu_custom_call.1} parent=5 // pred_check
      %p127 = pneg %p126
    $region18: #{tpu_custom_call.1} parent=5 // pred_check_branch
      %129 = sbr.rel (%p127) target = $region20
    $region19: #{tpu_custom_call.1} parent=5 // pred_region
      // Predicated region
      $region21: #{tpu_custom_call.1} parent=19 // pred_check
        %p130 = pneg %p50
      $region22: #{tpu_custom_call.1} parent=19 // pred_check_branch
        %132 = sbr.rel (%p130) target = $region24
      $region23: #{tpu_custom_call.1} parent=19 // pred_region
        %s133 = smul.u32 8, %s9
        %p134 = scmp.lt.s32.totalorder %s133, 15
        %s135 = scalar_select %p134, %s133, 15
        %s136 = smul.addr %s135, 4
        %s137 = scalar_lea.vmem %s1, %s136
        %s138 = smul.u32 8, %s9
      $region24: #{tpu_custom_call.1} parent=19 // pred_fallthru
        _
      // Predicated region
      $region25: #{tpu_custom_call.1} parent=19 // pred_check
        %p139 = pneg %p76
      $region26: #{tpu_custom_call.1} parent=19 // pred_check_branch
        %141 = sbr.rel (%p139) target = $region28
      $region27: #{tpu_custom_call.1} parent=19 // pred_region
        %s142 = smul.u32 2, %s9
        %p143 = scmp.lt.s32.totalorder %s142, 3
        %s144 = scalar_select %p143, %s142, 3
        %s145 = smul.addr %s144, 96
        %s146 = smul.addr %s145, 4
        %s147 = scalar_lea.vmem %s2, %s146
        %s148 = smul.u32 2, %s9
      $region28: #{tpu_custom_call.1} parent=19 // pred_fallthru
        _
    $region20: #{tpu_custom_call.1} parent=5 // pred_fallthru
      _
    %p149 = scmp.le.s32.totalorder 1, %s9
    %p150 = scmp.lt.s32.totalorder %s9, 3
    %p151 = pnand %p149, %p150
    %p152 = pneg %p151
    // Predicated region
    $region29: #{tpu_custom_call.1} parent=5 // pred_check
      _
    $region30: #{tpu_custom_call.1} parent=5 // pred_check_branch
      %154 = sbr.rel (%p151) target = $region32
    $region31: #{tpu_custom_call.1} parent=5 // pred_region
      %s155 = ssub.s32 %s9, 1
      %p156 = pneg %p30
      %p157 = pneg %p27
      %s158 = smul.u32 8, %s14
      %p159 = scmp.lt.s32.totalorder %s158, 15
      %s160 = scalar_select %p159, %s158, 15
      %s161 = smul.addr %s160, 4
      %s162 = scalar_lea.vmem %s1, %s161
      %p163 = pneg %p56
      %p164 = pneg %p53
      %s165 = smul.u32 2, %s14
      %p166 = scmp.lt.s32.totalorder %s165, 3
      %s167 = scalar_select %p166, %s165, 3
      %s168 = smul.addr %s167, 96
      %s169 = smul.addr %s168, 4
      %s170 = scalar_lea.vmem %s2, %s169
      %p171 = pneg %p82
      %p172 = pneg %p79
      %p173 = pneg %p108
      %p174 = pneg %p105
      %s175 = smul.u32 8, %s14
      %p176 = scmp.lt.s32.totalorder %s175, 15
      %s177 = scalar_select %p176, %s175, 15
      %s178 = smul.addr %s177, 2
      %s179 = smul.addr %s178, 8
      %s180 = scalar_lea.vmem %s3, %s179
      %s181 = smul.u32 8, %s14
      %p182 = scmp.lt.s32.totalorder %s181, 15
      %s183 = scalar_select %p182, %s181, 15
      %s184 = smul.addr %s183, 4
      %s185 = scalar_lea.vmem %s1, %s184
      %s186 = smul.u32 8, %s14
      %s187 = smul.u32 2, %s14
      %p188 = scmp.lt.s32.totalorder %s187, 3
      %s189 = scalar_select %p188, %s187, 3
      %s190 = smul.addr %s189, 96
      %s191 = smul.addr %s190, 4
      %s192 = scalar_lea.vmem %s2, %s191
      %s193 = smul.u32 2, %s14
      %s194 = smul.u32 8, %s14
      %p195 = scmp.lt.s32.totalorder %s194, 15
      %s196 = scalar_select %p195, %s194, 15
      %s197 = smul.addr %s196, 2
      %s198 = smul.addr %s197, 8
      %s199 = scalar_lea.vmem %s3, %s198
      %s200 = smul.u32 8, %s14
      %v202 = vld [vmem:[%s185] sm:$0xf]
      %v203 = vld [vmem:[%s185 + $0x4] sm:$0xf]
      %v204 = vld [vmem:[%s185 + $0x8] sm:$0xf]
      %v205 = vld [vmem:[%s185 + $0xc] sm:$0xf]
      %v206 = vld [vmem:[%s185 + $0x10] sm:$0xf]
      %v207 = vld [vmem:[%s185 + $0x14] sm:$0xf]
      %v208 = vld [vmem:[%s185 + $0x18] sm:$0xf]
      %v209 = vld [vmem:[%s185 + $0x1c] sm:$0xf]
      %v210 = vld [vmem:[%s0] sm:$0xff]
      %v211 = vld [vmem:[%s0 + $0x8] sm:$0xf]
      %v212 = vld [vmem:[%s0 + $0xc] sm:$0xff]
      %v213 = vld [vmem:[%s0 + $0x14] sm:$0xf]
      %v214 = vld [vmem:[%s0 + $0x18] sm:$0xff]
      %v215 = vld [vmem:[%s0 + $0x20] sm:$0xf]
      %v216 = vld [vmem:[%s0 + $0x24] sm:$0xff]
      %v217 = vld [vmem:[%s0 + $0x2c] sm:$0xf]
      %v218 = vld [vmem:[%s0 + $0x30] sm:$0xff]
      %v219 = vld [vmem:[%s0 + $0x38] sm:$0xf]
      %v220 = vld [vmem:[%s0 + $0x3c] sm:$0xff]
      %v221 = vld [vmem:[%s0 + $0x44] sm:$0xf]
      %v222 = vld [vmem:[%s0 + $0x48] sm:$0xff]
      %v223 = vld [vmem:[%s0 + $0x50] sm:$0xf]
      %v224 = vld [vmem:[%s0 + $0x54] sm:$0xff]
      %v225 = vld [vmem:[%s0 + $0x5c] sm:$0xf]
      %v234 = vunpack.c.l.b16 %v202
      %v235 = vunpack.c.l.b16 %v203
      %v236 = vunpack.c.l.b16 %v204
      %v237 = vunpack.c.l.b16 %v205
      %v238 = vunpack.c.l.b16 %v206
      %v239 = vunpack.c.l.b16 %v207
      %v240 = vunpack.c.l.b16 %v208
      %v241 = vunpack.c.l.b16 %v209
      %v242 = vpack.c.b16 %v235, %v234
      %v243 = vpack.c.b16 %v237, %v236
      %v244 = vpack.c.b16 %v239, %v238
      %v245 = vpack.c.b16 %v241, %v240
      %v262 = vunpack.c.l.b16 %v210
      %v263 = vunpack.c.h.b16 %v210
      %v264 = vunpack.c.l.b16 %v211
      %v265 = vunpack.c.l.b16 %v212
      %v266 = vunpack.c.h.b16 %v212
      %v267 = vunpack.c.l.b16 %v213
      %v268 = vunpack.c.l.b16 %v214
      %v269 = vunpack.c.h.b16 %v214
      %v270 = vunpack.c.l.b16 %v215
      %v271 = vunpack.c.l.b16 %v216
      %v272 = vunpack.c.h.b16 %v216
      %v273 = vunpack.c.l.b16 %v217
      %v274 = vunpack.c.l.b16 %v218
      %v275 = vunpack.c.h.b16 %v218
      %v276 = vunpack.c.l.b16 %v219
      %v277 = vunpack.c.l.b16 %v220
      %v278 = vunpack.c.h.b16 %v220
      %v279 = vunpack.c.l.b16 %v221
      %v280 = vunpack.c.l.b16 %v222
      %v281 = vunpack.c.h.b16 %v222
      %v282 = vunpack.c.l.b16 %v223
      %v283 = vunpack.c.l.b16 %v224
      %v284 = vunpack.c.h.b16 %v224
      %v285 = vunpack.c.l.b16 %v225
      %v286 = vpack.c.b16 %v265, %v262
      %v287 = vpack.c.b16 %v266, %v263
      %v288 = vpack.c.b16 %v267, %v264
      %v289 = vpack.c.b16 %v271, %v268
      %v290 = vpack.c.b16 %v272, %v269
      %v291 = vpack.c.b16 %v273, %v270
      %v292 = vpack.c.b16 %v277, %v274
      %v293 = vpack.c.b16 %v278, %v275
      %v294 = vpack.c.b16 %v279, %v276
      %v295 = vpack.c.b16 %v283, %v280
      %v296 = vpack.c.b16 %v284, %v281
      %v297 = vpack.c.b16 %v285, %v282
      %vm310 = vcmask 523264
      %v312 = vsel %vm310, %v242, 0
      %v315 = vsel %vm310, %v243, 0
      %v318 = vsel %vm310, %v244, 0
      %v321 = vsel %vm310, %v245, 0
      %323 = vmatprep.subr.bf16.mxu0 %v287
      %324 = vmatpush1.bf16.msra.mxu0 %v286
      %325 = vmatprep.subr.bf16.mxu0 %v290
      %326 = vmatpush1.bf16.msra.mxu0 %v289
      %327 = vmatprep.subr.bf16.mxu0 %v293
      %328 = vmatpush1.bf16.msra.mxu0 %v292
      %329 = vmatprep.subr.bf16.mxu0 %v296
      %330 = vmatpush1.bf16.msra.mxu0 %v295
      %331 = vmatprep.subr.bf16.mxu0 0
      %332 = vmatpush1.bf16.msra.mxu0 0
      %333 = vmatprep.subr.bf16.mxu0 0
      %334 = vmatpush1.bf16.msra.mxu0 0
      %335 = vmatprep.subr.bf16.mxu0 0
      %336 = vmatpush1.bf16.msra.mxu0 0
      %337 = vmatprep.subr.bf16.mxu0 0
      %338 = vmatpush1.bf16.msra.mxu0 0
      %339 = vmatprep.subr.bf16.mxu0 0
      %340 = vmatpush1.bf16.msra.mxu0 0
      %341 = vmatprep.subr.bf16.mxu0 0
      %342 = vmatpush1.bf16.msra.mxu0 0
      %343 = vmatprep.subr.bf16.mxu0 0
      %344 = vmatpush1.bf16.msra.mxu0 0
      %345 = vmatprep.subr.bf16.mxu0 0
      %346 = vmatpush1.bf16.msra.mxu0 0
      %347 = vmatprep.subr.bf16.mxu0 0
      %348 = vmatpush1.bf16.msra.mxu0 0
      %349 = vmatprep.subr.bf16.mxu0 0
      %350 = vmatpush1.bf16.msra.mxu0 0
      %351 = vmatprep.subr.bf16.mxu0 0
      %352 = vmatpush1.bf16.msra.mxu0 0
      %353 = vmatprep.subr.bf16.mxu0 0
      %354 = vmatpush1.bf16.msra.mxu0 0
      %355 = vmatprep.mubr.bf16.mxu0 0
      %356 = vmatmul.mubr.bf16.gmra.mrb[0].mxu0 %v312
      %v357 = vpop.f32.mrb[0].mxu0
      %v358 = vadd.f32 0.0, %v357
      %v359 = vpop.f32.mrb[0].mxu0
      %v360 = vadd.f32 0.0, %v359
      %v361 = vpop.f32.mrb[0].mxu0
      %v362 = vadd.f32 0.0, %v361
      %v363 = vpop.f32.mrb[0].mxu0
      %v364 = vadd.f32 0.0, %v363
      %365 = vmatprep.mubr.bf16.mxu0 0
      %366 = vmatmul.mubr.bf16.gmra.mrb[0].mxu0 %v315
      %v367 = vpop.f32.mrb[0].mxu0
      %v368 = vadd.f32 0.0, %v367
      %v369 = vpop.f32.mrb[0].mxu0
      %v370 = vadd.f32 0.0, %v369
      %v371 = vpop.f32.mrb[0].mxu0
      %v372 = vadd.f32 0.0, %v371
      %v373 = vpop.f32.mrb[0].mxu0
      %v374 = vadd.f32 0.0, %v373
      %375 = vmatprep.mubr.bf16.mxu0 0
      %376 = vmatmul.mubr.bf16.gmra.mrb[0].mxu0 %v318
      %v377 = vpop.f32.mrb[0].mxu0
      %v378 = vadd.f32 0.0, %v377
      %v379 = vpop.f32.mrb[0].mxu0
      %v380 = vadd.f32 0.0, %v379
      %v381 = vpop.f32.mrb[0].mxu0
      %v382 = vadd.f32 0.0, %v381
      %v383 = vpop.f32.mrb[0].mxu0
      %v384 = vadd.f32 0.0, %v383
      %385 = vmatprep.mubr.bf16.mxu0 0
      %386 = vmatmul.mubr.bf16.gmra.mrb[0].mxu0 %v321
      %v387 = vpop.f32.mrb[0].mxu0
      %v388 = vadd.f32 0.0, %v387
      %v389 = vpop.f32.mrb[0].mxu0
      %v390 = vadd.f32 0.0, %v389
      %v391 = vpop.f32.mrb[0].mxu0
      %v392 = vadd.f32 0.0, %v391
      %v393 = vpop.f32.mrb[0].mxu0
      %v394 = vadd.f32 0.0, %v393
      %395 = vdwg.mxu0
      %396 = vmatprep.subr.bf16.mxu0 0
      %397 = vmatpush1.bf16.msra.mxu0 %v288
      %398 = vmatprep.subr.bf16.mxu0 0
      %399 = vmatpush1.bf16.msra.mxu0 %v291
      %400 = vmatprep.subr.bf16.mxu0 0
      %401 = vmatpush1.bf16.msra.mxu0 %v294
      %402 = vmatprep.subr.bf16.mxu0 0
      %403 = vmatpush1.bf16.msra.mxu0 %v297
      %404 = vmatprep.subr.bf16.mxu0 0
      %405 = vmatpush1.bf16.msra.mxu0 0
      %406 = vmatprep.subr.bf16.mxu0 0
      %407 = vmatpush1.bf16.msra.mxu0 0
      %408 = vmatprep.subr.bf16.mxu0 0
      %409 = vmatpush1.bf16.msra.mxu0 0
      %410 = vmatprep.subr.bf16.mxu0 0
      %411 = vmatpush1.bf16.msra.mxu0 0
      %412 = vmatprep.subr.bf16.mxu0 0
      %413 = vmatpush1.bf16.msra.mxu0 0
      %414 = vmatprep.subr.bf16.mxu0 0
      %415 = vmatpush1.bf16.msra.mxu0 0
      %416 = vmatprep.subr.bf16.mxu0 0
      %417 = vmatpush1.bf16.msra.mxu0 0
      %418 = vmatprep.subr.bf16.mxu0 0
      %419 = vmatpush1.bf16.msra.mxu0 0
      %420 = vmatprep.subr.bf16.mxu0 0
      %421 = vmatpush1.bf16.msra.mxu0 0
      %422 = vmatprep.subr.bf16.mxu0 0
      %423 = vmatpush1.bf16.msra.mxu0 0
      %424 = vmatprep.subr.bf16.mxu0 0
      %425 = vmatpush1.bf16.msra.mxu0 0
      %426 = vmatprep.subr.bf16.mxu0 0
      %427 = vmatpush1.bf16.msra.mxu0 0
      %428 = vmatprep.mubr.bf16.mxu0 0
      %429 = vmatmul.mubr.bf16.gmra.mrb[0].mxu0 %v312
      %v430 = vpop.f32.mrb[0].mxu0
      %v431 = vadd.f32 0.0, %v430
      %v432 = vpop.f32.mrb[0].mxu0
      %v433 = vpop.f32.mrb[0].mxu0
      %v434 = vadd.f32 0.0, %v433
      %v435 = vpop.f32.mrb[0].mxu0
      %436 = vmatprep.mubr.bf16.mxu0 0
      %437 = vmatmul.mubr.bf16.gmra.mrb[0].mxu0 %v315
      %v438 = vpop.f32.mrb[0].mxu0
      %v439 = vadd.f32 0.0, %v438
      %v440 = vpop.f32.mrb[0].mxu0
      %v441 = vpop.f32.mrb[0].mxu0
      %v442 = vadd.f32 0.0, %v441
      %v443 = vpop.f32.mrb[0].mxu0
      %444 = vmatprep.mubr.bf16.mxu0 0
      %445 = vmatmul.mubr.bf16.gmra.mrb[0].mxu0 %v318
      %v446 = vpop.f32.mrb[0].mxu0
      %v447 = vadd.f32 0.0, %v446
      %v448 = vpop.f32.mrb[0].mxu0
      %v449 = vpop.f32.mrb[0].mxu0
      %v450 = vadd.f32 0.0, %v449
      %v451 = vpop.f32.mrb[0].mxu0
      %452 = vmatprep.mubr.bf16.mxu0 0
      %453 = vmatmul.mubr.bf16.gmra.mrb[0].mxu0 %v321
      %v454 = vpop.f32.mrb[0].mxu0
      %v455 = vadd.f32 0.0, %v454
      %v456 = vpop.f32.mrb[0].mxu0
      %v457 = vpop.f32.mrb[0].mxu0
      %v458 = vadd.f32 0.0, %v457
      %v459 = vpop.f32.mrb[0].mxu0
      %460 = vdwg.mxu0
      %v461 = vpack.c.bf16 %v362, %v358
      %v462 = vpack.c.bf16 %v364, %v360
      %v463 = vpack.c.bf16 %v434, %v431
      %v464 = vpack.c.bf16 %v372, %v368
      %v465 = vpack.c.bf16 %v374, %v370
      %v466 = vpack.c.bf16 %v442, %v439
      %v467 = vpack.c.bf16 %v382, %v378
      %v468 = vpack.c.bf16 %v384, %v380
      %v469 = vpack.c.bf16 %v450, %v447
      %v470 = vpack.c.bf16 %v392, %v388
      %v471 = vpack.c.bf16 %v394, %v390
      %v472 = vpack.c.bf16 %v458, %v455
      %v473 = vld [vmem:[%s192] sm:$0xff]
      %v474 = vld [vmem:[%s192 + $0x8] sm:$0xff]
      %v475 = vld [vmem:[%s192 + $0x10] sm:$0xff]
      %v476 = vld [vmem:[%s192 + $0x18] sm:$0xff]
      %v477 = vld [vmem:[%s192 + $0x20] sm:$0xff]
      %v478 = vld [vmem:[%s192 + $0x28] sm:$0xff]
      %v479 = vld [vmem:[%s192 + $0x30] sm:$0xff]
      %v480 = vld [vmem:[%s192 + $0x38] sm:$0xff]
      %v481 = vld [vmem:[%s192 + $0x40] sm:$0xff]
      %v482 = vld [vmem:[%s192 + $0x48] sm:$0xff]
      %v483 = vld [vmem:[%s192 + $0x50] sm:$0xff]
      %v484 = vld [vmem:[%s192 + $0x58] sm:$0xff]
      %v485 = vld [vmem:[%s192 + $0x60] sm:$0xff]
      %v486 = vld [vmem:[%s192 + $0x68] sm:$0xff]
      %v487 = vld [vmem:[%s192 + $0x70] sm:$0xff]
      %v488 = vld [vmem:[%s192 + $0x78] sm:$0xff]
      %v489 = vld [vmem:[%s192 + $0x80] sm:$0xff]
      %v490 = vld [vmem:[%s192 + $0x88] sm:$0xff]
      %v491 = vld [vmem:[%s192 + $0x90] sm:$0xff]
      %v492 = vld [vmem:[%s192 + $0x98] sm:$0xff]
      %v493 = vld [vmem:[%s192 + $0xa0] sm:$0xff]
      %v494 = vld [vmem:[%s192 + $0xa8] sm:$0xff]
      %v495 = vld [vmem:[%s192 + $0xb0] sm:$0xff]
      %v496 = vld [vmem:[%s192 + $0xb8] sm:$0xff]
      %v497 = vld [vmem:[%s192 + $0xc0] sm:$0xff]
      %v498 = vld [vmem:[%s192 + $0xc8] sm:$0xff]
      %v499 = vld [vmem:[%s192 + $0xd0] sm:$0xff]
      %v500 = vld [vmem:[%s192 + $0xd8] sm:$0xff]
      %v501 = vld [vmem:[%s192 + $0xe0] sm:$0xff]
      %v502 = vld [vmem:[%s192 + $0xe8] sm:$0xff]
      %v503 = vld [vmem:[%s192 + $0xf0] sm:$0xff]
      %v504 = vld [vmem:[%s192 + $0xf8] sm:$0xff]
      %v505 = vld [vmem:[%s192 + $0x100] sm:$0xff]
      %v506 = vld [vmem:[%s192 + $0x108] sm:$0xff]
      %v507 = vld [vmem:[%s192 + $0x110] sm:$0xff]
      %v508 = vld [vmem:[%s192 + $0x118] sm:$0xff]
      %v509 = vld [vmem:[%s192 + $0x120] sm:$0xff]
      %v510 = vld [vmem:[%s192 + $0x128] sm:$0xff]
      %v511 = vld [vmem:[%s192 + $0x130] sm:$0xff]
      %v512 = vld [vmem:[%s192 + $0x138] sm:$0xff]
      %v513 = vld [vmem:[%s192 + $0x140] sm:$0xff]
      %v514 = vld [vmem:[%s192 + $0x148] sm:$0xff]
      %v515 = vld [vmem:[%s192 + $0x150] sm:$0xff]
      %v516 = vld [vmem:[%s192 + $0x158] sm:$0xff]
      %v517 = vld [vmem:[%s192 + $0x160] sm:$0xff]
      %v518 = vld [vmem:[%s192 + $0x168] sm:$0xff]
      %v519 = vld [vmem:[%s192 + $0x170] sm:$0xff]
      %v520 = vld [vmem:[%s192 + $0x178] sm:$0xff]
      %v569 = vunpack.c.l.b16 %v473
      %v570 = vunpack.c.h.b16 %v473
      %v571 = vunpack.c.l.b16 %v474
      %v572 = vunpack.c.h.b16 %v474
      %v573 = vunpack.c.l.b16 %v475
      %v574 = vunpack.c.h.b16 %v475
      %v575 = vunpack.c.l.b16 %v476
      %v576 = vunpack.c.h.b16 %v476
      %v577 = vunpack.c.l.b16 %v477
      %v578 = vunpack.c.h.b16 %v477
      %v579 = vunpack.c.l.b16 %v478
      %v580 = vunpack.c.h.b16 %v478
      %v581 = vunpack.c.l.b16 %v479
      %v582 = vunpack.c.h.b16 %v479
      %v583 = vunpack.c.l.b16 %v480
      %v584 = vunpack.c.h.b16 %v480
      %v585 = vunpack.c.l.b16 %v481
      %v586 = vunpack.c.h.b16 %v481
      %v587 = vunpack.c.l.b16 %v482
      %v588 = vunpack.c.h.b16 %v482
      %v589 = vunpack.c.l.b16 %v483
      %v590 = vunpack.c.h.b16 %v483
      %v591 = vunpack.c.l.b16 %v484
      %v592 = vunpack.c.h.b16 %v484
      %v593 = vunpack.c.l.b16 %v485
      %v594 = vunpack.c.h.b16 %v485
      %v595 = vunpack.c.l.b16 %v486
      %v596 = vunpack.c.h.b16 %v486
      %v597 = vunpack.c.l.b16 %v487
      %v598 = vunpack.c.h.b16 %v487
      %v599 = vunpack.c.l.b16 %v488
      %v600 = vunpack.c.h.b16 %v488
      %v601 = vunpack.c.l.b16 %v489
      %v602 = vunpack.c.h.b16 %v489
      %v603 = vunpack.c.l.b16 %v490
      %v604 = vunpack.c.h.b16 %v490
      %v605 = vunpack.c.l.b16 %v491
      %v606 = vunpack.c.h.b16 %v491
      %v607 = vunpack.c.l.b16 %v492
      %v608 = vunpack.c.h.b16 %v492
      %v609 = vunpack.c.l.b16 %v493
      %v610 = vunpack.c.h.b16 %v493
      %v611 = vunpack.c.l.b16 %v494
      %v612 = vunpack.c.h.b16 %v494
      %v613 = vunpack.c.l.b16 %v495
      %v614 = vunpack.c.h.b16 %v495
      %v615 = vunpack.c.l.b16 %v496
      %v616 = vunpack.c.h.b16 %v496
      %v617 = vunpack.c.l.b16 %v497
      %v618 = vunpack.c.h.b16 %v497
      %v619 = vunpack.c.l.b16 %v498
      %v620 = vunpack.c.h.b16 %v498
      %v621 = vunpack.c.l.b16 %v499
      %v622 = vunpack.c.h.b16 %v499
      %v623 = vunpack.c.l.b16 %v500
      %v624 = vunpack.c.h.b16 %v500
      %v625 = vunpack.c.l.b16 %v501
      %v626 = vunpack.c.h.b16 %v501
      %v627 = vunpack.c.l.b16 %v502
      %v628 = vunpack.c.h.b16 %v502
      %v629 = vunpack.c.l.b16 %v503
      %v630 = vunpack.c.h.b16 %v503
      %v631 = vunpack.c.l.b16 %v504
      %v632 = vunpack.c.h.b16 %v504
      %v633 = vunpack.c.l.b16 %v505
      %v634 = vunpack.c.h.b16 %v505
      %v635 = vunpack.c.l.b16 %v506
      %v636 = vunpack.c.h.b16 %v506
      %v637 = vunpack.c.l.b16 %v507
      %v638 = vunpack.c.h.b16 %v507
      %v639 = vunpack.c.l.b16 %v508
      %v640 = vunpack.c.h.b16 %v508
      %v641 = vunpack.c.l.b16 %v509
      %v642 = vunpack.c.h.b16 %v509
      %v643 = vunpack.c.l.b16 %v510
      %v644 = vunpack.c.h.b16 %v510
      %v645 = vunpack.c.l.b16 %v511
      %v646 = vunpack.c.h.b16 %v511
      %v647 = vunpack.c.l.b16 %v512
      %v648 = vunpack.c.h.b16 %v512
      %v649 = vunpack.c.l.b16 %v513
      %v650 = vunpack.c.h.b16 %v513
      %v651 = vunpack.c.l.b16 %v514
      %v652 = vunpack.c.h.b16 %v514
      %v653 = vunpack.c.l.b16 %v515
      %v654 = vunpack.c.h.b16 %v515
      %v655 = vunpack.c.l.b16 %v516
      %v656 = vunpack.c.h.b16 %v516
      %v657 = vunpack.c.l.b16 %v517
      %v658 = vunpack.c.h.b16 %v517
      %v659 = vunpack.c.l.b16 %v518
      %v660 = vunpack.c.h.b16 %v518
      %v661 = vunpack.c.l.b16 %v519
      %v662 = vunpack.c.h.b16 %v519
      %v663 = vunpack.c.l.b16 %v520
      %v664 = vunpack.c.h.b16 %v520
      %v665 = vpack.c.b16 %v571, %v569
      %v666 = vpack.c.b16 %v572, %v570
      %v667 = vpack.c.b16 %v575, %v573
      %v668 = vpack.c.b16 %v576, %v574
      %v669 = vpack.c.b16 %v579, %v577
      %v670 = vpack.c.b16 %v580, %v578
      %v671 = vpack.c.b16 %v583, %v581
      %v672 = vpack.c.b16 %v584, %v582
      %v673 = vpack.c.b16 %v587, %v585
      %v674 = vpack.c.b16 %v588, %v586
      %v675 = vpack.c.b16 %v591, %v589
      %v676 = vpack.c.b16 %v592, %v590
      %v677 = vpack.c.b16 %v595, %v593
      %v678 = vpack.c.b16 %v596, %v594
      %v679 = vpack.c.b16 %v599, %v597
      %v680 = vpack.c.b16 %v600, %v598
      %v681 = vpack.c.b16 %v603, %v601
      %v682 = vpack.c.b16 %v604, %v602
      %v683 = vpack.c.b16 %v607, %v605
      %v684 = vpack.c.b16 %v608, %v606
      %v685 = vpack.c.b16 %v611, %v609
      %v686 = vpack.c.b16 %v612, %v610
      %v687 = vpack.c.b16 %v615, %v613
      %v688 = vpack.c.b16 %v616, %v614
      %v689 = vpack.c.b16 %v619, %v617
      %v690 = vpack.c.b16 %v620, %v618
      %v691 = vpack.c.b16 %v623, %v621
      %v692 = vpack.c.b16 %v624, %v622
      %v693 = vpack.c.b16 %v627, %v625
      %v694 = vpack.c.b16 %v628, %v626
      %v695 = vpack.c.b16 %v631, %v629
      %v696 = vpack.c.b16 %v632, %v630
      %v697 = vpack.c.b16 %v635, %v633
      %v698 = vpack.c.b16 %v636, %v634
      %v699 = vpack.c.b16 %v639, %v637
      %v700 = vpack.c.b16 %v640, %v638
      %v701 = vpack.c.b16 %v643, %v641
      %v702 = vpack.c.b16 %v644, %v642
      %v703 = vpack.c.b16 %v647, %v645
      %v704 = vpack.c.b16 %v648, %v646
      %v705 = vpack.c.b16 %v651, %v649
      %v706 = vpack.c.b16 %v652, %v650
      %v707 = vpack.c.b16 %v655, %v653
      %v708 = vpack.c.b16 %v656, %v654
      %v709 = vpack.c.b16 %v659, %v657
      %v710 = vpack.c.b16 %v660, %v658
      %v711 = vpack.c.b16 %v663, %v661
      %v712 = vpack.c.b16 %v664, %v662
      %761 = vmatprep.subr.bf16.mxu0 %v666
      %762 = vmatpush1.bf16.msra.mxu0 %v665
      %763 = vmatprep.subr.bf16.mxu0 %v668
      %764 = vmatpush1.bf16.msra.mxu0 %v667
      %765 = vmatprep.subr.bf16.mxu0 %v670
      %766 = vmatpush1.bf16.msra.mxu0 %v669
      %767 = vmatprep.subr.bf16.mxu0 %v672
      %768 = vmatpush1.bf16.msra.mxu0 %v671
      %769 = vmatprep.subr.bf16.mxu0 %v674
      %770 = vmatpush1.bf16.msra.mxu0 %v673
      %771 = vmatprep.subr.bf16.mxu0 %v676
      %772 = vmatpush1.bf16.msra.mxu0 %v675
      %773 = vmatprep.subr.bf16.mxu0 %v678
      %774 = vmatpush1.bf16.msra.mxu0 %v677
      %775 = vmatprep.subr.bf16.mxu0 %v680
      %776 = vmatpush1.bf16.msra.mxu0 %v679
      %777 = vmatprep.subr.bf16.mxu0 %v682
      %778 = vmatpush1.bf16.msra.mxu0 %v681
      %779 = vmatprep.subr.bf16.mxu0 %v684
      %780 = vmatpush1.bf16.msra.mxu0 %v683
      %781 = vmatprep.subr.bf16.mxu0 %v686
      %782 = vmatpush1.bf16.msra.mxu0 %v685
      %783 = vmatprep.subr.bf16.mxu0 %v688
      %784 = vmatpush1.bf16.msra.mxu0 %v687
      %785 = vmatprep.subr.bf16.mxu0 %v690
      %786 = vmatpush1.bf16.msra.mxu0 %v689
      %787 = vmatprep.subr.bf16.mxu0 %v692
      %788 = vmatpush1.bf16.msra.mxu0 %v691
      %789 = vmatprep.subr.bf16.mxu0 %v694
      %790 = vmatpush1.bf16.msra.mxu0 %v693
      %791 = vmatprep.subr.bf16.mxu0 %v696
      %792 = vmatpush1.bf16.msra.mxu0 %v695
      %793 = vmatprep.mubr.bf16.mxu0 %v462
      %794 = vmatmul.mubr.bf16.gmra.mrb[0].mxu0 %v461
      %v795 = vpop.f32.mrb[0].mxu0
      %v796 = vadd.f32 0.0, %v795
      %v797 = vpop.f32.mrb[0].mxu0
      %v798 = vadd.f32 0.0, %v797
      %v799 = vpop.f32.mrb[0].mxu0
      %v800 = vadd.f32 0.0, %v799
      %v801 = vpop.f32.mrb[0].mxu0
      %v802 = vadd.f32 0.0, %v801
      %803 = vmatprep.mubr.bf16.mxu0 %v465
      %804 = vmatmul.mubr.bf16.gmra.mrb[0].mxu0 %v464
      %v805 = vpop.f32.mrb[0].mxu0
      %v806 = vadd.f32 0.0, %v805
      %v807 = vpop.f32.mrb[0].mxu0
      %v808 = vadd.f32 0.0, %v807
      %v809 = vpop.f32.mrb[0].mxu0
      %v810 = vadd.f32 0.0, %v809
      %v811 = vpop.f32.mrb[0].mxu0
      %v812 = vadd.f32 0.0, %v811
      %813 = vdwg.mxu0
      %814 = vmatprep.subr.bf16.mxu0 %v698
      %815 = vmatpush1.bf16.msra.mxu0 %v697
      %816 = vmatprep.subr.bf16.mxu0 %v700
      %817 = vmatpush1.bf16.msra.mxu0 %v699
      %818 = vmatprep.subr.bf16.mxu0 %v702
      %819 = vmatpush1.bf16.msra.mxu0 %v701
      %820 = vmatprep.subr.bf16.mxu0 %v704
      %821 = vmatpush1.bf16.msra.mxu0 %v703
      %822 = vmatprep.subr.bf16.mxu0 %v706
      %823 = vmatpush1.bf16.msra.mxu0 %v705
      %824 = vmatprep.subr.bf16.mxu0 %v708
      %825 = vmatpush1.bf16.msra.mxu0 %v707
      %826 = vmatprep.subr.bf16.mxu0 %v710
      %827 = vmatpush1.bf16.msra.mxu0 %v709
      %828 = vmatprep.subr.bf16.mxu0 %v712
      %829 = vmatpush1.bf16.msra.mxu0 %v711
      %830 = vmatprep.subr.bf16.mxu0 0
      %831 = vmatpush1.bf16.msra.mxu0 0
      %832 = vmatprep.subr.bf16.mxu0 0
      %833 = vmatpush1.bf16.msra.mxu0 0
      %834 = vmatprep.subr.bf16.mxu0 0
      %835 = vmatpush1.bf16.msra.mxu0 0
      %836 = vmatprep.subr.bf16.mxu0 0
      %837 = vmatpush1.bf16.msra.mxu0 0
      %838 = vmatprep.subr.bf16.mxu0 0
      %839 = vmatpush1.bf16.msra.mxu0 0
      %840 = vmatprep.subr.bf16.mxu0 0
      %841 = vmatpush1.bf16.msra.mxu0 0
      %842 = vmatprep.subr.bf16.mxu0 0
      %843 = vmatpush1.bf16.msra.mxu0 0
      %844 = vmatprep.subr.bf16.mxu0 0
      %845 = vmatpush1.bf16.msra.mxu0 0
      %846 = vmatprep.mubr.bf16.mxu0 0
      %847 = vmatmul.mubr.bf16.gmra.mrb[0].mxu0 %v463
      %v848 = vpop.f32.mrb[0].mxu0
      %v849 = vadd.f32 %v796, %v848
      %v850 = vpop.f32.mrb[0].mxu0
      %v851 = vadd.f32 %v798, %v850
      %v852 = vpop.f32.mrb[0].mxu0
      %v853 = vadd.f32 %v800, %v852
      %v854 = vpop.f32.mrb[0].mxu0
      %v855 = vadd.f32 %v802, %v854
      %856 = vmatprep.mubr.bf16.mxu0 0
      %857 = vmatmul.mubr.bf16.gmra.mrb[0].mxu0 %v466
      %v858 = vpop.f32.mrb[0].mxu0
      %v859 = vadd.f32 %v806, %v858
      %v860 = vpop.f32.mrb[0].mxu0
      %v861 = vadd.f32 %v808, %v860
      %v862 = vpop.f32.mrb[0].mxu0
      %v863 = vadd.f32 %v810, %v862
      %v864 = vpop.f32.mrb[0].mxu0
      %v865 = vadd.f32 %v812, %v864
      %866 = vdwg.mxu0
      %867 = vst [vmem:[%s199] sm:$0xff] %v849
      %868 = vst.msk [vmem:[%s199 + $0x8] sm:$0xff] %vm310, %v851
      %869 = vst [vmem:[%s199 + $0x10] sm:$0xff] %v853
      %870 = vst.msk [vmem:[%s199 + $0x18] sm:$0xff] %vm310, %v855
      %871 = vst [vmem:[%s199 + $0x20] sm:$0xff] %v859
      %872 = vst.msk [vmem:[%s199 + $0x28] sm:$0xff] %vm310, %v861
      %873 = vst [vmem:[%s199 + $0x30] sm:$0xff] %v863
      %874 = vst.msk [vmem:[%s199 + $0x38] sm:$0xff] %vm310, %v865
      %s875 = scalar_lea.vmem %s192, 384
      %v876 = vld [vmem:[%s875] sm:$0xff]
      %v877 = vld [vmem:[%s875 + $0x8] sm:$0xff]
      %v878 = vld [vmem:[%s875 + $0x10] sm:$0xff]
      %v879 = vld [vmem:[%s875 + $0x18] sm:$0xff]
      %v880 = vld [vmem:[%s875 + $0x20] sm:$0xff]
      %v881 = vld [vmem:[%s875 + $0x28] sm:$0xff]
      %v882 = vld [vmem:[%s875 + $0x30] sm:$0xff]
      %v883 = vld [vmem:[%s875 + $0x38] sm:$0xff]
      %v884 = vld [vmem:[%s875 + $0x40] sm:$0xff]
      %v885 = vld [vmem:[%s875 + $0x48] sm:$0xff]
      %v886 = vld [vmem:[%s875 + $0x50] sm:$0xff]
      %v887 = vld [vmem:[%s875 + $0x58] sm:$0xff]
      %v888 = vld [vmem:[%s875 + $0x60] sm:$0xff]
      %v889 = vld [vmem:[%s875 + $0x68] sm:$0xff]
      %v890 = vld [vmem:[%s875 + $0x70] sm:$0xff]
      %v891 = vld [vmem:[%s875 + $0x78] sm:$0xff]
      %v892 = vld [vmem:[%s875 + $0x80] sm:$0xff]
      %v893 = vld [vmem:[%s875 + $0x88] sm:$0xff]
      %v894 = vld [vmem:[%s875 + $0x90] sm:$0xff]
      %v895 = vld [vmem:[%s875 + $0x98] sm:$0xff]
      %v896 = vld [vmem:[%s875 + $0xa0] sm:$0xff]
      %v897 = vld [vmem:[%s875 + $0xa8] sm:$0xff]
      %v898 = vld [vmem:[%s875 + $0xb0] sm:$0xff]
      %v899 = vld [vmem:[%s875 + $0xb8] sm:$0xff]
      %v900 = vld [vmem:[%s875 + $0xc0] sm:$0xff]
      %v901 = vld [vmem:[%s875 + $0xc8] sm:$0xff]
      %v902 = vld [vmem:[%s875 + $0xd0] sm:$0xff]
      %v903 = vld [vmem:[%s875 + $0xd8] sm:$0xff]
      %v904 = vld [vmem:[%s875 + $0xe0] sm:$0xff]
      %v905 = vld [vmem:[%s875 + $0xe8] sm:$0xff]
      %v906 = vld [vmem:[%s875 + $0xf0] sm:$0xff]
      %v907 = vld [vmem:[%s875 + $0xf8] sm:$0xff]
      %v908 = vld [vmem:[%s875 + $0x100] sm:$0xff]
      %v909 = vld [vmem:[%s875 + $0x108] sm:$0xff]
      %v910 = vld [vmem:[%s875 + $0x110] sm:$0xff]
      %v911 = vld [vmem:[%s875 + $0x118] sm:$0xff]
      %v912 = vld [vmem:[%s875 + $0x120] sm:$0xff]
      %v913 = vld [vmem:[%s875 + $0x128] sm:$0xff]
      %v914 = vld [vmem:[%s875 + $0x130] sm:$0xff]
      %v915 = vld [vmem:[%s875 + $0x138] sm:$0xff]
      %v916 = vld [vmem:[%s875 + $0x140] sm:$0xff]
      %v917 = vld [vmem:[%s875 + $0x148] sm:$0xff]
      %v918 = vld [vmem:[%s875 + $0x150] sm:$0xff]
      %v919 = vld [vmem:[%s875 + $0x158] sm:$0xff]
      %v920 = vld [vmem:[%s875 + $0x160] sm:$0xff]
      %v921 = vld [vmem:[%s875 + $0x168] sm:$0xff]
      %v922 = vld [vmem:[%s875 + $0x170] sm:$0xff]
      %v923 = vld [vmem:[%s875 + $0x178] sm:$0xff]
      %v972 = vunpack.c.l.b16 %v876
      %v973 = vunpack.c.h.b16 %v876
      %v974 = vunpack.c.l.b16 %v877
      %v975 = vunpack.c.h.b16 %v877
      %v976 = vunpack.c.l.b16 %v878
      %v977 = vunpack.c.h.b16 %v878
      %v978 = vunpack.c.l.b16 %v879
      %v979 = vunpack.c.h.b16 %v879
      %v980 = vunpack.c.l.b16 %v880
      %v981 = vunpack.c.h.b16 %v880
      %v982 = vunpack.c.l.b16 %v881
      %v983 = vunpack.c.h.b16 %v881
      %v984 = vunpack.c.l.b16 %v882
      %v985 = vunpack.c.h.b16 %v882
      %v986 = vunpack.c.l.b16 %v883
      %v987 = vunpack.c.h.b16 %v883
      %v988 = vunpack.c.l.b16 %v884
      %v989 = vunpack.c.h.b16 %v884
      %v990 = vunpack.c.l.b16 %v885
      %v991 = vunpack.c.h.b16 %v885
      %v992 = vunpack.c.l.b16 %v886
      %v993 = vunpack.c.h.b16 %v886
      %v994 = vunpack.c.l.b16 %v887
      %v995 = vunpack.c.h.b16 %v887
      %v996 = vunpack.c.l.b16 %v888
      %v997 = vunpack.c.h.b16 %v888
      %v998 = vunpack.c.l.b16 %v889
      %v999 = vunpack.c.h.b16 %v889
      %v1000 = vunpack.c.l.b16 %v890
      %v1001 = vunpack.c.h.b16 %v890
      %v1002 = vunpack.c.l.b16 %v891
      %v1003 = vunpack.c.h.b16 %v891
      %v1004 = vunpack.c.l.b16 %v892
      %v1005 = vunpack.c.h.b16 %v892
      %v1006 = vunpack.c.l.b16 %v893
      %v1007 = vunpack.c.h.b16 %v893
      %v1008 = vunpack.c.l.b16 %v894
      %v1009 = vunpack.c.h.b16 %v894
      %v1010 = vunpack.c.l.b16 %v895
      %v1011 = vunpack.c.h.b16 %v895
      %v1012 = vunpack.c.l.b16 %v896
      %v1013 = vunpack.c.h.b16 %v896
      %v1014 = vunpack.c.l.b16 %v897
      %v1015 = vunpack.c.h.b16 %v897
      %v1016 = vunpack.c.l.b16 %v898
      %v1017 = vunpack.c.h.b16 %v898
      %v1018 = vunpack.c.l.b16 %v899
      %v1019 = vunpack.c.h.b16 %v899
      %v1020 = vunpack.c.l.b16 %v900
      %v1021 = vunpack.c.h.b16 %v900
      %v1022 = vunpack.c.l.b16 %v901
      %v1023 = vunpack.c.h.b16 %v901
      %v1024 = vunpack.c.l.b16 %v902
      %v1025 = vunpack.c.h.b16 %v902
      %v1026 = vunpack.c.l.b16 %v903
      %v1027 = vunpack.c.h.b16 %v903
      %v1028 = vunpack.c.l.b16 %v904
      %v1029 = vunpack.c.h.b16 %v904
      %v1030 = vunpack.c.l.b16 %v905
      %v1031 = vunpack.c.h.b16 %v905
      %v1032 = vunpack.c.l.b16 %v906
      %v1033 = vunpack.c.h.b16 %v906
      %v1034 = vunpack.c.l.b16 %v907
      %v1035 = vunpack.c.h.b16 %v907
      %v1036 = vunpack.c.l.b16 %v908
      %v1037 = vunpack.c.h.b16 %v908
      %v1038 = vunpack.c.l.b16 %v909
      %v1039 = vunpack.c.h.b16 %v909
      %v1040 = vunpack.c.l.b16 %v910
      %v1041 = vunpack.c.h.b16 %v910
      %v1042 = vunpack.c.l.b16 %v911
      %v1043 = vunpack.c.h.b16 %v911
      %v1044 = vunpack.c.l.b16 %v912
      %v1045 = vunpack.c.h.b16 %v912
      %v1046 = vunpack.c.l.b16 %v913
      %v1047 = vunpack.c.h.b16 %v913
      %v1048 = vunpack.c.l.b16 %v914
      %v1049 = vunpack.c.h.b16 %v914
      %v1050 = vunpack.c.l.b16 %v915
      %v1051 = vunpack.c.h.b16 %v915
      %v1052 = vunpack.c.l.b16 %v916
      %v1053 = vunpack.c.h.b16 %v916
      %v1054 = vunpack.c.l.b16 %v917
      %v1055 = vunpack.c.h.b16 %v917
      %v1056 = vunpack.c.l.b16 %v918
      %v1057 = vunpack.c.h.b16 %v918
      %v1058 = vunpack.c.l.b16 %v919
      %v1059 = vunpack.c.h.b16 %v919
      %v1060 = vunpack.c.l.b16 %v920
      %v1061 = vunpack.c.h.b16 %v920
      %v1062 = vunpack.c.l.b16 %v921
      %v1063 = vunpack.c.h.b16 %v921
      %v1064 = vunpack.c.l.b16 %v922
      %v1065 = vunpack.c.h.b16 %v922
      %v1066 = vunpack.c.l.b16 %v923
      %v1067 = vunpack.c.h.b16 %v923
      %v1068 = vpack.c.b16 %v974, %v972
      %v1069 = vpack.c.b16 %v975, %v973
      %v1070 = vpack.c.b16 %v978, %v976
      %v1071 = vpack.c.b16 %v979, %v977
      %v1072 = vpack.c.b16 %v982, %v980
      %v1073 = vpack.c.b16 %v983, %v981
      %v1074 = vpack.c.b16 %v986, %v984
      %v1075 = vpack.c.b16 %v987, %v985
      %v1076 = vpack.c.b16 %v990, %v988
      %v1077 = vpack.c.b16 %v991, %v989
      %v1078 = vpack.c.b16 %v994, %v992
      %v1079 = vpack.c.b16 %v995, %v993
      %v1080 = vpack.c.b16 %v998, %v996
      %v1081 = vpack.c.b16 %v999, %v997
      %v1082 = vpack.c.b16 %v1002, %v1000
      %v1083 = vpack.c.b16 %v1003, %v1001
      %v1084 = vpack.c.b16 %v1006, %v1004
      %v1085 = vpack.c.b16 %v1007, %v1005
      %v1086 = vpack.c.b16 %v1010, %v1008
      %v1087 = vpack.c.b16 %v1011, %v1009
      %v1088 = vpack.c.b16 %v1014, %v1012
      %v1089 = vpack.c.b16 %v1015, %v1013
      %v1090 = vpack.c.b16 %v1018, %v1016
      %v1091 = vpack.c.b16 %v1019, %v1017
      %v1092 = vpack.c.b16 %v1022, %v1020
      %v1093 = vpack.c.b16 %v1023, %v1021
      %v1094 = vpack.c.b16 %v1026, %v1024
      %v1095 = vpack.c.b16 %v1027, %v1025
      %v1096 = vpack.c.b16 %v1030, %v1028
      %v1097 = vpack.c.b16 %v1031, %v1029
      %v1098 = vpack.c.b16 %v1034, %v1032
      %v1099 = vpack.c.b16 %v1035, %v1033
      %v1100 = vpack.c.b16 %v1038, %v1036
      %v1101 = vpack.c.b16 %v1039, %v1037
      %v1102 = vpack.c.b16 %v1042, %v1040
      %v1103 = vpack.c.b16 %v1043, %v1041
      %v1104 = vpack.c.b16 %v1046, %v1044
      %v1105 = vpack.c.b16 %v1047, %v1045
      %v1106 = vpack.c.b16 %v1050, %v1048
      %v1107 = vpack.c.b16 %v1051, %v1049
      %v1108 = vpack.c.b16 %v1054, %v1052
      %v1109 = vpack.c.b16 %v1055, %v1053
      %v1110 = vpack.c.b16 %v1058, %v1056
      %v1111 = vpack.c.b16 %v1059, %v1057
      %v1112 = vpack.c.b16 %v1062, %v1060
      %v1113 = vpack.c.b16 %v1063, %v1061
      %v1114 = vpack.c.b16 %v1066, %v1064
      %v1115 = vpack.c.b16 %v1067, %v1065
      %1164 = vmatprep.subr.bf16.mxu0 %v1069
      %1165 = vmatpush1.bf16.msra.mxu0 %v1068
      %1166 = vmatprep.subr.bf16.mxu0 %v1071
      %1167 = vmatpush1.bf16.msra.mxu0 %v1070
      %1168 = vmatprep.subr.bf16.mxu0 %v1073
      %1169 = vmatpush1.bf16.msra.mxu0 %v1072
      %1170 = vmatprep.subr.bf16.mxu0 %v1075
      %1171 = vmatpush1.bf16.msra.mxu0 %v1074
      %1172 = vmatprep.subr.bf16.mxu0 %v1077
      %1173 = vmatpush1.bf16.msra.mxu0 %v1076
      %1174 = vmatprep.subr.bf16.mxu0 %v1079
      %1175 = vmatpush1.bf16.msra.mxu0 %v1078
      %1176 = vmatprep.subr.bf16.mxu0 %v1081
      %1177 = vmatpush1.bf16.msra.mxu0 %v1080
      %1178 = vmatprep.subr.bf16.mxu0 %v1083
      %1179 = vmatpush1.bf16.msra.mxu0 %v1082
      %1180 = vmatprep.subr.bf16.mxu0 %v1085
      %1181 = vmatpush1.bf16.msra.mxu0 %v1084
      %1182 = vmatprep.subr.bf16.mxu0 %v1087
      %1183 = vmatpush1.bf16.msra.mxu0 %v1086
      %1184 = vmatprep.subr.bf16.mxu0 %v1089
      %1185 = vmatpush1.bf16.msra.mxu0 %v1088
      %1186 = vmatprep.subr.bf16.mxu0 %v1091
      %1187 = vmatpush1.bf16.msra.mxu0 %v1090
      %1188 = vmatprep.subr.bf16.mxu0 %v1093
      %1189 = vmatpush1.bf16.msra.mxu0 %v1092
      %1190 = vmatprep.subr.bf16.mxu0 %v1095
      %1191 = vmatpush1.bf16.msra.mxu0 %v1094
      %1192 = vmatprep.subr.bf16.mxu0 %v1097
      %1193 = vmatpush1.bf16.msra.mxu0 %v1096
      %1194 = vmatprep.subr.bf16.mxu0 %v1099
      %1195 = vmatpush1.bf16.msra.mxu0 %v1098
      %1196 = vmatprep.mubr.bf16.mxu0 %v468
      %1197 = vmatmul.mubr.bf16.gmra.mrb[0].mxu0 %v467
      %v1198 = vpop.f32.mrb[0].mxu0
      %v1199 = vadd.f32 0.0, %v1198
      %v1200 = vpop.f32.mrb[0].mxu0
      %v1201 = vadd.f32 0.0, %v1200
      %v1202 = vpop.f32.mrb[0].mxu0
      %v1203 = vadd.f32 0.0, %v1202
      %v1204 = vpop.f32.mrb[0].mxu0
      %v1205 = vadd.f32 0.0, %v1204
      %1206 = vmatprep.mubr.bf16.mxu0 %v471
      %1207 = vmatmul.mubr.bf16.gmra.mrb[0].mxu0 %v470
      %v1208 = vpop.f32.mrb[0].mxu0
      %v1209 = vadd.f32 0.0, %v1208
      %v1210 = vpop.f32.mrb[0].mxu0
      %v1211 = vadd.f32 0.0, %v1210
      %v1212 = vpop.f32.mrb[0].mxu0
      %v1213 = vadd.f32 0.0, %v1212
      %v1214 = vpop.f32.mrb[0].mxu0
      %v1215 = vadd.f32 0.0, %v1214
      %1216 = vdwg.mxu0
      %1217 = vmatprep.subr.bf16.mxu0 %v1101
      %1218 = vmatpush1.bf16.msra.mxu0 %v1100
      %1219 = vmatprep.subr.bf16.mxu0 %v1103
      %1220 = vmatpush1.bf16.msra.mxu0 %v1102
      %1221 = vmatprep.subr.bf16.mxu0 %v1105
      %1222 = vmatpush1.bf16.msra.mxu0 %v1104
      %1223 = vmatprep.subr.bf16.mxu0 %v1107
      %1224 = vmatpush1.bf16.msra.mxu0 %v1106
      %1225 = vmatprep.subr.bf16.mxu0 %v1109
      %1226 = vmatpush1.bf16.msra.mxu0 %v1108
      %1227 = vmatprep.subr.bf16.mxu0 %v1111
      %1228 = vmatpush1.bf16.msra.mxu0 %v1110
      %1229 = vmatprep.subr.bf16.mxu0 %v1113
      %1230 = vmatpush1.bf16.msra.mxu0 %v1112
      %1231 = vmatprep.subr.bf16.mxu0 %v1115
      %1232 = vmatpush1.bf16.msra.mxu0 %v1114
      %1233 = vmatprep.subr.bf16.mxu0 0
      %1234 = vmatpush1.bf16.msra.mxu0 0
      %1235 = vmatprep.subr.bf16.mxu0 0
      %1236 = vmatpush1.bf16.msra.mxu0 0
      %1237 = vmatprep.subr.bf16.mxu0 0
      %1238 = vmatpush1.bf16.msra.mxu0 0
      %1239 = vmatprep.subr.bf16.mxu0 0
      %1240 = vmatpush1.bf16.msra.mxu0 0
      %1241 = vmatprep.subr.bf16.mxu0 0
      %1242 = vmatpush1.bf16.msra.mxu0 0
      %1243 = vmatprep.subr.bf16.mxu0 0
      %1244 = vmatpush1.bf16.msra.mxu0 0
      %1245 = vmatprep.subr.bf16.mxu0 0
      %1246 = vmatpush1.bf16.msra.mxu0 0
      %1247 = vmatprep.subr.bf16.mxu0 0
      %1248 = vmatpush1.bf16.msra.mxu0 0
      %1249 = vmatprep.mubr.bf16.mxu0 0
      %1250 = vmatmul.mubr.bf16.gmra.mrb[0].mxu0 %v469
      %v1251 = vpop.f32.mrb[0].mxu0
      %v1252 = vadd.f32 %v1199, %v1251
      %v1253 = vpop.f32.mrb[0].mxu0
      %v1254 = vadd.f32 %v1201, %v1253
      %v1255 = vpop.f32.mrb[0].mxu0
      %v1256 = vadd.f32 %v1203, %v1255
      %v1257 = vpop.f32.mrb[0].mxu0
      %v1258 = vadd.f32 %v1205, %v1257
      %1259 = vmatprep.mubr.bf16.mxu0 0
      %1260 = vmatmul.mubr.bf16.gmra.mrb[0].mxu0 %v472
      %v1261 = vpop.f32.mrb[0].mxu0
      %v1262 = vadd.f32 %v1209, %v1261
      %v1263 = vpop.f32.mrb[0].mxu0
      %v1264 = vadd.f32 %v1211, %v1263
      %v1265 = vpop.f32.mrb[0].mxu0
      %v1266 = vadd.f32 %v1213, %v1265
      %v1267 = vpop.f32.mrb[0].mxu0
      %v1268 = vadd.f32 %v1215, %v1267
      %1269 = vdwg.mxu0
      %1270 = vst [vmem:[%s199 + $0x40] sm:$0xff] %v1252
      %1271 = vst.msk [vmem:[%s199 + $0x48] sm:$0xff] %vm310, %v1254
      %1272 = vst [vmem:[%s199 + $0x50] sm:$0xff] %v1256
      %1273 = vst.msk [vmem:[%s199 + $0x58] sm:$0xff] %vm310, %v1258
      %1274 = vst [vmem:[%s199 + $0x60] sm:$0xff] %v1262
      %1275 = vst.msk [vmem:[%s199 + $0x68] sm:$0xff] %vm310, %v1264
      %1276 = vst [vmem:[%s199 + $0x70] sm:$0xff] %v1266
      %1277 = vst.msk [vmem:[%s199 + $0x78] sm:$0xff] %vm310, %v1268
      %s1278 = smul.u32 8, %s14
      %p1279 = scmp.lt.s32.totalorder %s1278, 15
      %s1280 = scalar_select %p1279, %s1278, 15
      %s1281 = smul.addr %s1280, 2
      %s1282 = smul.addr %s1281, 8
      %s1283 = scalar_lea.vmem %s3, %s1282
      // Predicated region
      $region33: #{tpu_custom_call.1} parent=31 // pred_check
        %p1284 = pneg %p105
      $region34: #{tpu_custom_call.1} parent=31 // pred_check_branch
        %1286 = sbr.rel (%p1284) target = $region36
      $region35: #{tpu_custom_call.1} parent=31 // pred_region
        %s1287 = smul.u32 8, %s14
      $region36: #{tpu_custom_call.1} parent=31 // pred_fallthru
        _
    $region32: #{tpu_custom_call.1} parent=5 // pred_fallthru
      _
    %p1288 = scmp.le.s32.totalorder 2, %s9
    // Predicated region
    $region37: #{tpu_custom_call.1} parent=5 // pred_check
      %p1289 = pneg %p1288
    $region38: #{tpu_custom_call.1} parent=5 // pred_check_branch
      %1291 = sbr.rel (%p1289) target = $region40
    $region39: #{tpu_custom_call.1} parent=5 // pred_region
      %s1292 = ssub.s32 %s9, 2
      // Predicated region
      $region41: #{tpu_custom_call.1} parent=39 // pred_check
        %p1293 = pneg %p111
      $region42: #{tpu_custom_call.1} parent=39 // pred_check_branch
        %1295 = sbr.rel (%p1293) target = $region44
      $region43: #{tpu_custom_call.1} parent=39 // pred_region
        %s1296 = smul.u32 8, %s15
        %p1297 = scmp.lt.s32.totalorder %s1296, 15
        %s1298 = scalar_select %p1297, %s1296, 15
        %s1299 = smul.addr %s1298, 2
        %s1300 = smul.addr %s1299, 8
        %s1301 = scalar_lea.vmem %s3, %s1300
      $region44: #{tpu_custom_call.1} parent=39 // pred_fallthru
        _
    $region40: #{tpu_custom_call.1} parent=5 // pred_fallthru
      _
  $region6: #{tpu_custom_call.1} parent=0 // loop_footer
    %s13 = sadd.s32 1, %s9
  $region7: #{tpu_custom_call.1} parent=0 // loop_footer_branch
    %8 = sbr.rel target = $region3
  $region8: #{tpu_custom_call.1} parent=0 // loop_exit
    _

</llo_original>
